<compile_context>
chip_gen: v6e
topology: v6e:2x2x1
jax: 0.10.0
libtpu: 0.0.40
codegen_flags: <defaults>
</compile_context>

<pallas_src>
import math

import jax
import jax.numpy as jnp
from jax.experimental import pallas as pl
from jax.experimental.pallas import tpu as pltpu

LANES = 128
SUBLANES = 8
DEFAULT_BLOCK_ROWS = 4096        # (4096, 128) f32 tile = 2 MiB per input


def _default_num_splits():
    """2-way reduction split only on 2-TensorCore parts (v7x); 1 elsewhere."""
    try:
        kind = jax.devices()[0].device_kind.lower()
    except Exception:
        return 1
    return 2 if "v7" in kind else 1


def _xla_masked_sums(o, l):
    o = o.astype(jnp.float32)
    l = l.astype(jnp.float32)
    valid = l != jnp.float32(255.0)
    s = jnp.sum(jnp.where(valid, jnp.abs(o - l), jnp.float32(0.0)))
    c = jnp.sum(valid.astype(jnp.float32))
    return s, c


def depth_loss(out, label, *, block_rows=DEFAULT_BLOCK_ROWS, num_splits=None):
    """Masked L1 depth loss. out/label: same shape (e.g. NCHW), any float dtype.

    Note: if every label pixel equals 255 the result is 0/0 = NaN, matching
    torch L1Loss over an empty masked_select.
    """
    assert out.shape == label.shape
    n = math.prod(out.shape)

    if num_splits is None:
        num_splits = _default_num_splits()

    # Flatten (free reshape of a contiguous array). Keep native dtype; cast in-kernel.
    out_flat = out.reshape(-1)
    label_flat = label.reshape(-1)

    rows = n // LANES
    if rows < SUBLANES:
        # Tiny input (< 1024 elements): not worth a kernel launch.
        s, c = _xla_masked_sums(out_flat, label_flat)
        return s / c

    n_main = rows * LANES
    tail = n - n_main                       # 0..127 leftover elements
    if tail:
        # TODO(synk): a fully copy-free path for non-128-multiple sizes would need
        # memory_space=pl.ANY + manual make_async_copy; the prefix slice below
        # costs one extra pass over the inputs only in this rare case.
        out_main = jax.lax.slice(out_flat, (0,), (n_main,))
        lab_main = jax.lax.slice(label_flat, (0,), (n_main,))
        tail_sum, tail_cnt = _xla_masked_sums(out_flat[n_main:], label_flat[n_main:])
    else:
        out_main, lab_main = out_flat, label_flat
        tail_sum = jnp.float32(0.0)
        tail_cnt = jnp.float32(0.0)

    out2d = out_main.reshape(rows, LANES)
    lab2d = lab_main.reshape(rows, LANES)

    # Block geometry. block_rows is a multiple of 8 (>= 8 since rows >= 8);
    # a ragged last block (rows % block_rows) is handled in-kernel.
    block_rows = min(block_rows, rows)
    block_rows -= block_rows % SUBLANES
    num_blocks = pl.cdiv(rows, block_rows)
    num_splits = max(1, min(num_splits, num_blocks))
    steps = pl.cdiv(num_blocks, num_splits)
    has_dup = num_splits * steps != num_blocks
    rem = rows % block_rows
    has_ragged = rem != 0
    last_block_rows = rem if has_ragged else block_rows
    n_interior = num_blocks - (1 if has_ragged else 0)

    if has_dup:
        # Clamp so a ragged split never issues a fully out-of-bounds DMA; the
        # duplicated block is skipped in-kernel (blk-based pl.when).
        def in_index_map(s, i):
            return (jnp.minimum(s * steps + i, num_blocks - 1), 0)
    else:
        def in_index_map(s, i):
            return (s * steps + i, 0)

    def kernel(out_ref, lab_ref, sum_ref, cnt_ref):
        i = pl.program_id(1)

        @pl.when(i == 0)
        def _init():
            sum_ref[...] = jnp.zeros_like(sum_ref)
            cnt_ref[...] = jnp.zeros_like(cnt_ref)

        blk = pl.program_id(0) * steps + i

        def accumulate(valid_of):
            o = out_ref[...].astype(jnp.float32)
            l = lab_ref[...].astype(jnp.float32)
            valid = valid_of(l)
            # where (select) is NaN-safe against undefined out-of-bounds rows.
            absdiff = jnp.where(valid, jnp.abs(o - l), jnp.float32(0.0))
            ones = valid.astype(jnp.float32)
            # Lane/sublane-preserving fold to (8,128): pure VPU vreg adds.
            sum_ref[0, :, :] += absdiff.reshape(-1, SUBLANES, LANES).sum(axis=0)
            cnt_ref[0, :, :] += ones.reshape(-1, SUBLANES, LANES).sum(axis=0)

        def interior_mask(l):
            return l != jnp.float32(255.0)

        def ragged_mask(l):
            rids = jax.lax.broadcasted_iota(jnp.int32, (block_rows, LANES), 0)
            return (rids < last_block_rows) & interior_mask(l)

        if not has_ragged and not has_dup:
            # Every grid step is a full, real block: no row mask, no guard.
            accumulate(interior_mask)
        else:
            if n_interior > 0:
                @pl.when(blk < n_interior)
                def _interior():
                    accumulate(interior_mask)

            if has_ragged:
                @pl.when(blk == num_blocks - 1)
                def _ragged():
                    accumulate(ragged_mask)
            # blk >= num_blocks (clamped duplicates of a ragged split): skipped.

    sums, cnts = pl.pallas_call(
        kernel,
        out_shape=(
            jax.ShapeDtypeStruct((num_splits, SUBLANES, LANES), jnp.float32),
            jax.ShapeDtypeStruct((num_splits, SUBLANES, LANES), jnp.float32),
        ),
        grid_spec=pltpu.PrefetchScalarGridSpec(
            num_scalar_prefetch=0,
            grid=(num_splits, steps),
            in_specs=[
                pl.BlockSpec((block_rows, LANES), in_index_map),
                pl.BlockSpec((block_rows, LANES), in_index_map),
            ],
            out_specs=[
                pl.BlockSpec((1, SUBLANES, LANES), lambda s, i: (s, 0, 0)),
                pl.BlockSpec((1, SUBLANES, LANES), lambda s, i: (s, 0, 0)),
            ],
        ),
        compiler_params=pltpu.CompilerParams(
            # On toolchains where "parallel" does not shard across v7x's two
            # TensorCores, switch axis 0 to pltpu.CORE_PARALLEL.
            dimension_semantics=("parallel", "arbitrary"),
        ),
    )(out2d, lab2d)

    # Tiny (num_splits, 8, 128) cross-lane / cross-split finalize in XLA.
    return (jnp.sum(sums) + tail_sum) / (jnp.sum(cnts) + tail_cnt)


def depth_loss_ref(out, label):
    mask = label != 255.0
    diff = jnp.abs(out - label)
    return jnp.sum(jnp.where(mask, diff, 0.0)) / jnp.sum(mask.astype(jnp.float32))


def _make_inputs(key, shape, invalid_frac=0.3):
    k1, k2, k3 = jax.random.split(key, 3)
    out = jax.random.normal(k1, shape, dtype=jnp.float32) * 2.0 + 5.0
    label = jax.random.normal(k2, shape, dtype=jnp.float32) * 2.0 + 5.0
    # Mark ~30% of label pixels as invalid (255), like depth GT with holes.
    invalid = jax.random.uniform(k3, shape) < invalid_frac
    label = jnp.where(invalid, jnp.float32(255.0), label)
    return out, label


if __name__ == "__main__":
    key = jax.random.PRNGKey(0)
    configs = [
        ((2, 4, 16, 16), {}),              # aligned NCHW: zero-copy, single block
        ((2, 3, 17, 19), {}),              # n % 128 != 0: XLA tail + ragged rows
        ((1, 1, 192, 768), {}),            # aligned, single large tile (default block_rows)
        ((1, 1, 192, 768),                 # multi-block + 2-way split + ragged + duplicate skip
         {"block_rows": 256, "num_splits": 2}),
    ]
    for idx, (shape, kwargs) in enumerate(configs):
        k = jax.random.fold_in(key, idx)
        out, label = _make_inputs(k, shape)
        loss = depth_loss(out, label, **kwargs)
        jax.block_until_ready(loss)
        ref = depth_loss_ref(out, label)
        assert jnp.allclose(loss, ref, rtol=1e-5, atol=1e-6), (shape, kwargs, loss, ref)
    print("KERNEL_OK")
</pallas_src>

<mosaic_0001>
module attributes {stable_mosaic.version = 11 : i64} {
  func.func @kernel(%arg0: i32, %arg1: i32, %arg2: memref<16x128xf32, #tpu.memory_space<vmem>>, %arg3: memref<16x128xf32, #tpu.memory_space<vmem>>, %arg4: memref<1x8x128xf32, #tpu.memory_space<vmem>>, %arg5: memref<1x8x128xf32, #tpu.memory_space<vmem>>) attributes {dimension_semantics = [#tpu.dimension_semantics<parallel>, #tpu.dimension_semantics<arbitrary>], iteration_bounds = array<i64: 1, 1>, scalar_prefetch = 0 : i64, scratch_operands = 0 : i64, tpu.core_type = #tpu.core_type<tc>, window_params = [{transform_indices = @transform_0, window_bounds = array<i64: 16, 128>}, {transform_indices = @transform_1, window_bounds = array<i64: 16, 128>}, {transform_indices = @transform_2, window_bounds = array<i64: 1, 8, 128>}, {transform_indices = @transform_3, window_bounds = array<i64: 1, 8, 128>}]} {
    %c0_i32 = arith.constant 0 : i32
    %0 = arith.cmpi eq, %arg1, %c0_i32 : i32
    %1 = arith.extui %0 : i1 to i32
    %c0_i32_0 = arith.constant 0 : i32
    %2 = arith.cmpi ne, %1, %c0_i32_0 : i32
    scf.if %2 {
      %cst_19 = arith.constant 0.000000e+00 : f32
      %29 = vector.broadcast %cst_19 : f32 to vector<1x8x128xf32>
      %c0_20 = arith.constant 0 : index
      %c0_21 = arith.constant 0 : index
      %c0_22 = arith.constant 0 : index
      %30 = vector.load %arg4[%c0_20, %c0_21, %c0_22] : memref<1x8x128xf32, #tpu.memory_space<vmem>>, vector<1x8x128xf32>
      tpu.vector_store %arg4[%c0_20, %c0_21, %c0_22], %29 {strides = array<i32>} : memref<1x8x128xf32, #tpu.memory_space<vmem>>, vector<1x8x128xf32>,
      %cst_23 = arith.constant 0.000000e+00 : f32
      %31 = vector.broadcast %cst_23 : f32 to vector<1x8x128xf32>
      %c0_24 = arith.constant 0 : index
      %c0_25 = arith.constant 0 : index
      %c0_26 = arith.constant 0 : index
      %32 = vector.load %arg5[%c0_24, %c0_25, %c0_26] : memref<1x8x128xf32, #tpu.memory_space<vmem>>, vector<1x8x128xf32>
      tpu.vector_store %arg5[%c0_24, %c0_25, %c0_26], %31 {strides = array<i32>} : memref<1x8x128xf32, #tpu.memory_space<vmem>>, vector<1x8x128xf32>,
    } else {
    }
    %c0 = arith.constant 0 : index
    %c0_1 = arith.constant 0 : index
    %3 = vector.load %arg2[%c0, %c0_1] : memref<16x128xf32, #tpu.memory_space<vmem>>, vector<16x128xf32>
    %c0_2 = arith.constant 0 : index
    %c0_3 = arith.constant 0 : index
    %4 = vector.load %arg3[%c0_2, %c0_3] : memref<16x128xf32, #tpu.memory_space<vmem>>, vector<16x128xf32>
    %cst = arith.constant 2.550000e+02 : f32
    %5 = vector.broadcast %cst : f32 to vector<16x128xf32>
    %6 = arith.cmpf one, %4, %5 : vector<16x128xf32>
    %7 = arith.subf %3, %4 : vector<16x128xf32>
    %8 = math.absf %7 : vector<16x128xf32>
    %cst_4 = arith.constant 0.000000e+00 : f32
    %9 = vector.broadcast %cst_4 : f32 to vector<16x128xf32>
    %10 = arith.select %6, %8, %9 : vector<16x128xi1>, vector<16x128xf32>
    %11 = arith.extui %6 : vector<16x128xi1> to vector<16x128xi32>
    %12 = arith.sitofp %11 : vector<16x128xi32> to vector<16x128xf32>
    %c0_5 = arith.constant 0 : index
    %c0_6 = arith.constant 0 : index
    %c0_7 = arith.constant 0 : index
    %13 = vector.load %arg4[%c0_5, %c0_6, %c0_7] : memref<1x8x128xf32, #tpu.memory_space<vmem>>, vector<1x8x128xf32>
    %14 = vector.shape_cast %13 : vector<1x8x128xf32> to vector<8x128xf32>
    %15 = vector.shape_cast %10 : vector<16x128xf32> to vector<2x8x128xf32>
    %cst_8 = arith.constant dense<0.000000e+00> : vector<8x128xf32>
    %16 = vector.multi_reduction <add>, %15, %cst_8 [0] : vector<2x8x128xf32> to vector<8x128xf32>
    %17 = arith.addf %14, %16 : vector<8x128xf32>
    %c0_9 = arith.constant 0 : index
    %c0_10 = arith.constant 0 : index
    %c0_11 = arith.constant 0 : index
    %18 = vector.load %arg4[%c0_9, %c0_10, %c0_11] : memref<1x8x128xf32, #tpu.memory_space<vmem>>, vector<1x8x128xf32>
    %19 = vector.shape_cast %18 : vector<1x8x128xf32> to vector<8x128xf32>
    %20 = vector.shape_cast %17 : vector<8x128xf32> to vector<1x8x128xf32>
    tpu.vector_store %arg4[%c0_9, %c0_10, %c0_11], %20 {strides = array<i32>} : memref<1x8x128xf32, #tpu.memory_space<vmem>>, vector<1x8x128xf32>,
    %c0_12 = arith.constant 0 : index
    %c0_13 = arith.constant 0 : index
    %c0_14 = arith.constant 0 : index
    %21 = vector.load %arg5[%c0_12, %c0_13, %c0_14] : memref<1x8x128xf32, #tpu.memory_space<vmem>>, vector<1x8x128xf32>
    %22 = vector.shape_cast %21 : vector<1x8x128xf32> to vector<8x128xf32>
    %23 = vector.shape_cast %12 : vector<16x128xf32> to vector<2x8x128xf32>
    %cst_15 = arith.constant dense<0.000000e+00> : vector<8x128xf32>
    %24 = vector.multi_reduction <add>, %23, %cst_15 [0] : vector<2x8x128xf32> to vector<8x128xf32>
    %25 = arith.addf %22, %24 : vector<8x128xf32>
    %c0_16 = arith.constant 0 : index
    %c0_17 = arith.constant 0 : index
    %c0_18 = arith.constant 0 : index
    %26 = vector.load %arg5[%c0_16, %c0_17, %c0_18] : memref<1x8x128xf32, #tpu.memory_space<vmem>>, vector<1x8x128xf32>
    %27 = vector.shape_cast %26 : vector<1x8x128xf32> to vector<8x128xf32>
    %28 = vector.shape_cast %25 : vector<8x128xf32> to vector<1x8x128xf32>
    tpu.vector_store %arg5[%c0_16, %c0_17, %c0_18], %28 {strides = array<i32>} : memref<1x8x128xf32, #tpu.memory_space<vmem>>, vector<1x8x128xf32>,
    return
  }
  func.func @transform_0(%arg0: i32, %arg1: i32) -> (i32, i32) {
    %c1_i32 = arith.constant 1 : i32
    %0 = arith.muli %arg0, %c1_i32 : i32
    %1 = arith.addi %0, %arg1 : i32
    %c0_i32 = arith.constant 0 : i32
    %c0_i32_0 = arith.constant 0 : i32
    return %1, %c0_i32 : i32, i32
  }
  func.func @transform_1(%arg0: i32, %arg1: i32) -> (i32, i32) {
    %c1_i32 = arith.constant 1 : i32
    %0 = arith.muli %arg0, %c1_i32 : i32
    %1 = arith.addi %0, %arg1 : i32
    %c0_i32 = arith.constant 0 : i32
    %c0_i32_0 = arith.constant 0 : i32
    return %1, %c0_i32 : i32, i32
  }
  func.func @transform_2(%arg0: i32, %arg1: i32) -> (i32, i32, i32) {
    %c0_i32 = arith.constant 0 : i32
    %c0_i32_0 = arith.constant 0 : i32
    %c0_i32_1 = arith.constant 0 : i32
    return %arg0, %c0_i32, %c0_i32_0 : i32, i32, i32
  }
  func.func @transform_3(%arg0: i32, %arg1: i32) -> (i32, i32, i32) {
    %c0_i32 = arith.constant 0 : i32
    %c0_i32_0 = arith.constant 0 : i32
    %c0_i32_1 = arith.constant 0 : i32
    return %arg0, %c0_i32, %c0_i32_0 : i32, i32, i32
  }
}

</mosaic_0001>

<llo_original>
// kernel: tpu_custom_call.1
$region0: #{tpu_custom_call.1}
  #allocation0 [shape = 'u32[]', space=smem, size = 0x4, offset = 0x4, fixed_abs, tag = 'smem constant byte address 0x4 - core index']
  #allocation1 [shape = 'u32[144,128]{1,0:T(1,128)}', space=vmem, size = 0x12000, scoped, tag = 'internal scratch']
  %s0 = inlined_call_operand.hbm [shape: f32[16,128], index: 0, kind: input, shape index: {}]
  %s1 = inlined_call_operand.hbm [shape: f32[16,128], index: 1, kind: input, shape index: {}]
  %s2 = inlined_call_operand.hbm [shape: f32[1,8,128], index: 2, kind: output, shape index: {0}]
  %s3 = inlined_call_operand.hbm [shape: f32[1,8,128], index: 3, kind: output, shape index: {1}]
  %4 = xla_tuple %s2, %s3
  %s5 = sld [smem:[#allocation0]]
  $region38: #{tpu_custom_call.1} parent=0
    _
  %s7 = ssub.s32 1, %s5
  %s8 = scalar_select 0, %s7, %s5
  $region1: #{tpu_custom_call.1} parent=0
    #allocation2 [shape = 'u8[8192]{0}', space=vmem, size = 0x2000, scoped, tag = 'input window, operand 0, single buffered']
    #allocation3 [shape = 's32[1]{0}', space=sflag, size = 0x4, scoped, tag = 'scoped memory for tpu_custom_call.1']
    #allocation4 [shape = 's32[1]{0}', space=sflag, size = 0x4, scoped, tag = 'scoped memory for tpu_custom_call.1']
    #allocation5 [shape = 'u8[8192]{0}', space=vmem, size = 0x2000, scoped, tag = 'input window, operand 1, single buffered']
    #allocation6 [shape = 's32[1]{0}', space=sflag, size = 0x4, scoped, tag = 'scoped memory for tpu_custom_call.1']
    #allocation7 [shape = 'u8[4096]{0}', space=vmem, size = 0x1000, scoped, tag = 'output window, operand 0, single buffered']
    #allocation8 [shape = 'u8[4096]{0}', space=vmem, size = 0x1000, scoped, tag = 'output window, operand 1, single buffered']
    #allocation9 [shape = 's32[1]{0}', space=sflag, size = 0x4, scoped, tag = 'scoped memory for tpu_custom_call.1']
    %9 = vsyncpa [#allocation3], 0
    %10 = vsyncpa [#allocation6], 0
    %11 = vsyncpa [#allocation4], 0
    %12 = vsyncpa [#allocation9], 0
    // Predicated region
    $region2: #{tpu_custom_call.1} parent=1 // pred_check
      _
    $region3: #{tpu_custom_call.1} parent=1 // pred_check_branch
      %14 = sbr.rel (0) target = $region5
    $region4: #{tpu_custom_call.1} parent=1 // pred_region
      %s15 = sadd.s32 0, 0
      %s16 = smul.u32 2, %s15
      %s18 = ssub.s32 256, 256
      %19 = vsyncadd [#allocation3], %s18
      %s20 = smul.addr %s16, 128
      %s21 = scalar_lea.hbm %s0, %s20
      %s22 = sshll.u32 [#allocation2], 4
      %s23 = int_to_ptr.vmem [resolvable:$true] %s22
      %28 = dma.hbm_to_vmem [thread:$0]  %s21, 256, %s23, [#allocation3], 128, 128, 8
    $region5: #{tpu_custom_call.1} parent=1 // pred_fallthru
      _
    // Predicated region
    $region6: #{tpu_custom_call.1} parent=1 // pred_check
      _
    $region7: #{tpu_custom_call.1} parent=1 // pred_check_branch
      %30 = sbr.rel (0) target = $region9
    $region8: #{tpu_custom_call.1} parent=1 // pred_region
      %s31 = sadd.s32 0, 0
      %s32 = smul.u32 2, %s31
      %s34 = ssub.s32 256, 256
      %35 = vsyncadd [#allocation6], %s34
      %s36 = smul.addr %s32, 128
      %s37 = scalar_lea.hbm %s1, %s36
      %s38 = sshll.u32 [#allocation5], 4
      %s39 = int_to_ptr.vmem [resolvable:$true] %s38
      %44 = dma.hbm_to_vmem [thread:$0]  %s37, 256, %s39, [#allocation6], 128, 128, 8
    $region9: #{tpu_custom_call.1} parent=1 // pred_fallthru
      _
    // Predicated region
    $region10: #{tpu_custom_call.1} parent=1 // pred_check
      _
    $region11: #{tpu_custom_call.1} parent=1 // pred_check_branch
      %46 = sbr.rel (0) target = $region13
    $region12: #{tpu_custom_call.1} parent=1 // pred_region
      %47 = dma.done [#allocation3], 256
    $region13: #{tpu_custom_call.1} parent=1 // pred_fallthru
      _
    // Predicated region
    $region14: #{tpu_custom_call.1} parent=1 // pred_check
      _
    $region15: #{tpu_custom_call.1} parent=1 // pred_check_branch
      %49 = sbr.rel (0) target = $region17
    $region16: #{tpu_custom_call.1} parent=1 // pred_region
      %50 = dma.done [#allocation6], 256
    $region17: #{tpu_custom_call.1} parent=1 // pred_fallthru
      _
    %s51 = sadd.s32 0, 0
    %s52 = smul.u32 2, %s51
    %s53 = sadd.s32 0, 0
    %s54 = smul.u32 2, %s53
    %p55 = scmp.eq.s32.totalorder 0, 0
    // Predicated region
    $region18: #{tpu_custom_call.1} parent=1 // pred_check
      %p56 = pneg %p55
    $region19: #{tpu_custom_call.1} parent=1 // pred_check_branch
      %58 = sbr.rel (%p56) target = $region21
    $region20: #{tpu_custom_call.1} parent=1 // pred_region
      %59 = vst [vmem:[#allocation7] sm:$0xff] 0.0
      %60 = vst [vmem:[#allocation8] sm:$0xff] 0.0
    $region21: #{tpu_custom_call.1} parent=1 // pred_fallthru
      _
    %v61 = vld [vmem:[#allocation2] sm:$0xff]
    %v62 = vld [vmem:[#allocation2 + $0x8] sm:$0xff]
    %v63 = vld [vmem:[#allocation5] sm:$0xff]
    %v64 = vld [vmem:[#allocation5 + $0x8] sm:$0xff]
    %vm65 = vcmp.ne.f32.partialorder %v63, 255.0
    %vm66 = vcmp.ne.f32.partialorder %v64, 255.0
    %v67 = vsub.f32 %v61, %v63
    %v68 = vsub.f32 %v62, %v64
    %v69 = vand.u32 2147483647, %v67
    %v70 = vand.u32 2147483647, %v68
    %v71 = vsel %vm65, %v69, 0.0
    %v72 = vsel %vm66, %v70, 0.0
    %v73 = vsel %vm65, 1, 0
    %v74 = vsel %vm66, 1, 0
    %v75 = vcvt.s32.f32 %v73
    %v76 = vcvt.s32.f32 %v74
    %v77 = vld [vmem:[#allocation7] sm:$0xff]
    %v78 = vadd.f32 %v71, %v72
    %v79 = vadd.f32 %v77, %v78
    %80 = vst [vmem:[#allocation7] sm:$0xff] %v79
    %v81 = vld [vmem:[#allocation8] sm:$0xff]
    %v82 = vadd.f32 %v75, %v76
    %v83 = vadd.f32 %v81, %v82
    %84 = vst [vmem:[#allocation8] sm:$0xff] %v83
    // Predicated region
    $region22: #{tpu_custom_call.1} parent=1 // pred_check
      _
    $region23: #{tpu_custom_call.1} parent=1 // pred_check_branch
      %86 = sbr.rel (0) target = $region25
    $region24: #{tpu_custom_call.1} parent=1 // pred_region
      %s88 = ssub.s32 128, 128
      %89 = vsyncadd [#allocation4], %s88
      %s91 = sshll.u32 [#allocation7], 4
      %s92 = int_to_ptr.vmem [resolvable:$true] %s91
      %94 = dma.vmem_to_hbm [thread:$0]  %s92, 128, %s2, [#allocation4]
    $region25: #{tpu_custom_call.1} parent=1 // pred_fallthru
      _
    // Predicated region
    $region26: #{tpu_custom_call.1} parent=1 // pred_check
      _
    $region27: #{tpu_custom_call.1} parent=1 // pred_check_branch
      %96 = sbr.rel (0) target = $region29
    $region28: #{tpu_custom_call.1} parent=1 // pred_region
      %s98 = ssub.s32 128, 128
      %99 = vsyncadd [#allocation9], %s98
      %s101 = sshll.u32 [#allocation8], 4
      %s102 = int_to_ptr.vmem [resolvable:$true] %s101
      %104 = dma.vmem_to_hbm [thread:$0]  %s102, 128, %s3, [#allocation9]
    $region29: #{tpu_custom_call.1} parent=1 // pred_fallthru
      _
    // Predicated region
    $region30: #{tpu_custom_call.1} parent=1 // pred_check
      _
    $region31: #{tpu_custom_call.1} parent=1 // pred_check_branch
      %106 = sbr.rel (0) target = $region33
    $region32: #{tpu_custom_call.1} parent=1 // pred_region
      %107 = dma.done [#allocation4], 128
    $region33: #{tpu_custom_call.1} parent=1 // pred_fallthru
      _
    // Predicated region
    $region34: #{tpu_custom_call.1} parent=1 // pred_check
      _
    $region35: #{tpu_custom_call.1} parent=1 // pred_check_branch
      %109 = sbr.rel (0) target = $region37
    $region36: #{tpu_custom_call.1} parent=1 // pred_region
      %110 = dma.done [#allocation9], 128
    $region37: #{tpu_custom_call.1} parent=1 // pred_fallthru
      _
    %111 = vsyncpa [#allocation3], 1
    %112 = vsyncpa [#allocation6], 1
    %113 = vsyncpa [#allocation4], 1
    %114 = vsyncpa [#allocation9], 1

</llo_original>
